<compile_context>
chip_gen: v5e
topology: v5e:2x2
jax: 0.10.0
libtpu: 0.0.40
codegen_flags: <defaults>
</compile_context>

<pallas_src>
import jax
import jax.numpy as jnp
from jax.experimental import pallas as pl
from jax.experimental.pallas import tpu as pltpu

# env2048.env2048(4, 4): 4x4 board -> observation_space = 16, action_space = 4
N_STATES = 16
N_ACTIONS = 4
H1, H2, H3 = 50, 100, 40
PAD = 128            # lane-aligned hidden width (all hidden dims padded to 128)
NUM_LAYERS = 4


def _round_up(n, m):
    return (n + m - 1) // m * m


def _cdiv(a, b):
    return (a + b - 1) // b


def _mlp_kernel(x_ref, w_ref, b_ref, o_ref):
    # x_ref: (TB, 16) bf16
    # w_ref: (128, 4*128) bf16 packed/padded weight slab (layer i in cols [i*128,(i+1)*128))
    # b_ref: (8, 128) f32 bias slab (row i = bias of layer i)
    # o_ref: (TB, 128) f32 lane-dense padded logits (cols >= 4 are padding)
    x = x_ref[...]
    w = w_ref[...]
    b = b_ref[...]

    # layer 1: (TB,16) @ (16,128)  -- MXU bf16, f32 accumulate
    h = jnp.dot(x, w[0:N_STATES, 0:PAD],
                preferred_element_type=jnp.float32) + b[0:1, :]
    h = jnp.maximum(h, 0.0).astype(jnp.bfloat16)
    # layer 2: (TB,128) @ (128,128)
    h = jnp.dot(h, w[:, PAD:2 * PAD],
                preferred_element_type=jnp.float32) + b[1:2, :]
    h = jnp.maximum(h, 0.0).astype(jnp.bfloat16)
    # layer 3
    h = jnp.dot(h, w[:, 2 * PAD:3 * PAD],
                preferred_element_type=jnp.float32) + b[2:3, :]
    h = jnp.maximum(h, 0.0).astype(jnp.bfloat16)
    # output layer: write the full 128-lane padded logits (lane-dense store)
    logits = jnp.dot(h, w[:, 3 * PAD:4 * PAD],
                     preferred_element_type=jnp.float32) + b[3:4, :]
    o_ref[...] = logits.astype(o_ref.dtype)


def pack_params(params):
    """Zero-pad every layer to 128 lanes and pack into one weight slab + one bias slab.

    Weight slab: (128, 4*128) bf16, layer i occupies columns [i*128, (i+1)*128).
    Bias slab:   (8, 128) f32, row i holds bias of layer i (rows 4..7 unused).
    Zero padding is exact: padded hidden lanes stay identically 0 through ReLU.
    """
    dims = [(N_STATES, H1), (H1, H2), (H2, H3), (H3, N_ACTIONS)]
    w_slab = jnp.zeros((PAD, NUM_LAYERS * PAD), jnp.float32)
    b_slab = jnp.zeros((8, PAD), jnp.float32)
    for i, (fan_in, fan_out) in enumerate(dims, start=1):
        col0 = (i - 1) * PAD
        w_slab = w_slab.at[:fan_in, col0:col0 + fan_out].set(params[f"w{i}"])
        b_slab = b_slab.at[i - 1, :fan_out].set(params[f"b{i}"].reshape(-1))
    return w_slab.astype(jnp.bfloat16), b_slab


def net_forward(x, w_slab, b_slab, *, tb=2048):
    """x: (B, N_STATES) float32.  Returns (B, N_ACTIONS) float32."""
    B = x.shape[0]
    B_pad = _round_up(B, 8)                 # pad only to the sublane multiple
    # v7x has 2 TensorCores: cap TB at ceil(B_pad/2) (rounded to 8) so the
    # "parallel" batch axis has >= 2 grid steps whenever the batch is splittable.
    half = max(8, _round_up(_cdiv(B_pad, 2), 8))
    TB = max(8, min(tb, half))
    if B_pad != B:
        x = jnp.pad(x, ((0, B_pad - B), (0, 0)))
    x = x.astype(jnp.bfloat16)              # halve the activation DMA; MXU is bf16

    out = pl.pallas_call(
        _mlp_kernel,
        out_shape=jax.ShapeDtypeStruct((B_pad, PAD), jnp.float32),
        grid=(pl.cdiv(B_pad, TB),),         # partial tail block allowed
        in_specs=[
            pl.BlockSpec((TB, N_STATES), lambda i: (i, 0)),           # x tile
            pl.BlockSpec((PAD, NUM_LAYERS * PAD), lambda i: (0, 0)),   # weights (resident)
            pl.BlockSpec((8, PAD), lambda i: (0, 0)),                  # biases (resident)
        ],
        out_specs=pl.BlockSpec((TB, PAD), lambda i: (i, 0)),           # lane-dense output
        compiler_params=pltpu.CompilerParams(
            dimension_semantics=("parallel",)),
    )(x, w_slab, b_slab)
    return out[:B, :N_ACTIONS]


def init_params(key):
    """Weights ~ N(0, 0.1) (matching the module); biases use the default
    nn.Linear init U(-1/sqrt(fan_in), 1/sqrt(fan_in))."""
    dims = [(N_STATES, H1), (H1, H2), (H2, H3), (H3, N_ACTIONS)]
    params = {}
    for i, (fan_in, fan_out) in enumerate(dims, start=1):
        key, kw, kb = jax.random.split(key, 3)
        params[f"w{i}"] = 0.1 * jax.random.normal(kw, (fan_in, fan_out), jnp.float32)
        bound = 1.0 / jnp.sqrt(jnp.float32(fan_in))
        params[f"b{i}"] = jax.random.uniform(
            kb, (1, fan_out), jnp.float32, minval=-bound, maxval=bound)
    return params


def reference_forward(x, params):
    """Pure-JAX reference mirroring the kernel's bf16-matmul / f32-accumulate path."""
    def lin(h, w, b):
        return jnp.dot(h.astype(jnp.bfloat16), w.astype(jnp.bfloat16),
                       preferred_element_type=jnp.float32) + b
    h = jnp.maximum(lin(x, params["w1"], params["b1"]), 0.0)
    h = jnp.maximum(lin(h, params["w2"], params["b2"]), 0.0)
    h = jnp.maximum(lin(h, params["w3"], params["b3"]), 0.0)
    return lin(h, params["w4"], params["b4"])


if __name__ == "__main__":
    key = jax.random.PRNGKey(0)
    params = init_params(key)
    # One-time packing of the parameters into lane-aligned, bf16 VMEM slabs.
    w_slab, b_slab = pack_params(params)

    # Small single-tile batch (inference-style call).
    key, kx = jax.random.split(key)
    B = 8
    x = jax.random.normal(kx, (B, N_STATES), jnp.float32)
    actions_value = net_forward(x, w_slab, b_slab)
    jax.block_until_ready(actions_value)
    ref = reference_forward(x, params)
    assert actions_value.shape == (B, N_ACTIONS)
    assert jnp.allclose(actions_value, ref, atol=1e-2, rtol=1e-2)

    # Exercise the multi-step grid (>=2 tiles, partial tail block).
    key, kx2 = jax.random.split(key)
    B2 = 24
    x2 = jax.random.normal(kx2, (B2, N_STATES), jnp.float32)
    out2 = net_forward(x2, w_slab, b_slab)
    jax.block_until_ready(out2)
    ref2 = reference_forward(x2, params)
    assert out2.shape == (B2, N_ACTIONS)
    assert jnp.allclose(out2, ref2, atol=1e-2, rtol=1e-2)

    print("KERNEL_OK")
</pallas_src>

<mosaic_0001>
module attributes {stable_mosaic.version = 11 : i64} {
  func.func @_mlp_kernel(%arg0: i32, %arg1: memref<8x16xbf16, #tpu.memory_space<vmem>>, %arg2: memref<128x512xbf16, #tpu.memory_space<vmem>>, %arg3: memref<8x128xf32, #tpu.memory_space<vmem>>, %arg4: memref<8x128xf32, #tpu.memory_space<vmem>>) attributes {dimension_semantics = [#tpu.dimension_semantics<parallel>], iteration_bounds = array<i64: 1>, scalar_prefetch = 0 : i64, scratch_operands = 0 : i64, tpu.core_type = #tpu.core_type<tc>, window_params = [{transform_indices = @transform_0, window_bounds = array<i64: 8, 16>}, {pipeline_mode = #tpu.pipeline_mode<synchronous>, transform_indices = @transform_1, window_bounds = array<i64: 128, 512>}, {pipeline_mode = #tpu.pipeline_mode<synchronous>, transform_indices = @transform_2, window_bounds = array<i64: 8, 128>}, {transform_indices = @transform_3, window_bounds = array<i64: 8, 128>}]} {
    %c0 = arith.constant 0 : index
    %c0_0 = arith.constant 0 : index
    %0 = vector.load %arg1[%c0, %c0_0] : memref<8x16xbf16, #tpu.memory_space<vmem>>, vector<8x16xbf16>
    %c0_1 = arith.constant 0 : index
    %c0_2 = arith.constant 0 : index
    %1 = vector.load %arg2[%c0_1, %c0_2] : memref<128x512xbf16, #tpu.memory_space<vmem>>, vector<128x512xbf16>
    %c0_3 = arith.constant 0 : index
    %c0_4 = arith.constant 0 : index
    %2 = vector.load %arg3[%c0_3, %c0_4] : memref<8x128xf32, #tpu.memory_space<vmem>>, vector<8x128xf32>
    %3 = vector.extract_strided_slice %1 {offsets = [0, 0], sizes = [16, 128], strides = [1, 1]} : vector<128x512xbf16> to vector<16x128xbf16>
    %cst = arith.constant dense<0.000000e+00> : vector<8x128xf32>
    %4 = tpu.matmul %0, %3, %cst {dimension_numbers = #tpu.dot_dimension_numbers<[1], [0], [0], [1], [0, 0, 1, 1], [], []>} : vector<8x16xbf16>, vector<16x128xbf16>, vector<8x128xf32> -> vector<8x128xf32>
    %5 = vector.extract_strided_slice %2 {offsets = [0, 0], sizes = [1, 128], strides = [1, 1]} : vector<8x128xf32> to vector<1x128xf32>
    %6 = vector.broadcast %5 : vector<1x128xf32> to vector<8x128xf32>
    %7 = arith.addf %4, %6 : vector<8x128xf32>
    %cst_5 = arith.constant 0.000000e+00 : f32
    %8 = vector.broadcast %cst_5 : f32 to vector<8x128xf32>
    %9 = arith.maximumf %7, %8 : vector<8x128xf32>
    %10 = arith.truncf %9 : vector<8x128xf32> to vector<8x128xbf16>
    %11 = vector.extract_strided_slice %1 {offsets = [0, 128], sizes = [128, 128], strides = [1, 1]} : vector<128x512xbf16> to vector<128x128xbf16>
    %cst_6 = arith.constant dense<0.000000e+00> : vector<8x128xf32>
    %12 = tpu.matmul %10, %11, %cst_6 {dimension_numbers = #tpu.dot_dimension_numbers<[1], [0], [0], [1], [0, 0, 1, 1], [], []>} : vector<8x128xbf16>, vector<128x128xbf16>, vector<8x128xf32> -> vector<8x128xf32>
    %13 = vector.extract_strided_slice %2 {offsets = [1, 0], sizes = [1, 128], strides = [1, 1]} : vector<8x128xf32> to vector<1x128xf32>
    %14 = vector.broadcast %13 : vector<1x128xf32> to vector<8x128xf32>
    %15 = arith.addf %12, %14 : vector<8x128xf32>
    %cst_7 = arith.constant 0.000000e+00 : f32
    %16 = vector.broadcast %cst_7 : f32 to vector<8x128xf32>
    %17 = arith.maximumf %15, %16 : vector<8x128xf32>
    %18 = arith.truncf %17 : vector<8x128xf32> to vector<8x128xbf16>
    %19 = vector.extract_strided_slice %1 {offsets = [0, 256], sizes = [128, 128], strides = [1, 1]} : vector<128x512xbf16> to vector<128x128xbf16>
    %cst_8 = arith.constant dense<0.000000e+00> : vector<8x128xf32>
    %20 = tpu.matmul %18, %19, %cst_8 {dimension_numbers = #tpu.dot_dimension_numbers<[1], [0], [0], [1], [0, 0, 1, 1], [], []>} : vector<8x128xbf16>, vector<128x128xbf16>, vector<8x128xf32> -> vector<8x128xf32>
    %21 = vector.extract_strided_slice %2 {offsets = [2, 0], sizes = [1, 128], strides = [1, 1]} : vector<8x128xf32> to vector<1x128xf32>
    %22 = vector.broadcast %21 : vector<1x128xf32> to vector<8x128xf32>
    %23 = arith.addf %20, %22 : vector<8x128xf32>
    %cst_9 = arith.constant 0.000000e+00 : f32
    %24 = vector.broadcast %cst_9 : f32 to vector<8x128xf32>
    %25 = arith.maximumf %23, %24 : vector<8x128xf32>
    %26 = arith.truncf %25 : vector<8x128xf32> to vector<8x128xbf16>
    %27 = vector.extract_strided_slice %1 {offsets = [0, 384], sizes = [128, 128], strides = [1, 1]} : vector<128x512xbf16> to vector<128x128xbf16>
    %cst_10 = arith.constant dense<0.000000e+00> : vector<8x128xf32>
    %28 = tpu.matmul %26, %27, %cst_10 {dimension_numbers = #tpu.dot_dimension_numbers<[1], [0], [0], [1], [0, 0, 1, 1], [], []>} : vector<8x128xbf16>, vector<128x128xbf16>, vector<8x128xf32> -> vector<8x128xf32>
    %29 = vector.extract_strided_slice %2 {offsets = [3, 0], sizes = [1, 128], strides = [1, 1]} : vector<8x128xf32> to vector<1x128xf32>
    %30 = vector.broadcast %29 : vector<1x128xf32> to vector<8x128xf32>
    %31 = arith.addf %28, %30 : vector<8x128xf32>
    %c0_11 = arith.constant 0 : index
    %c0_12 = arith.constant 0 : index
    %32 = vector.load %arg4[%c0_11, %c0_12] : memref<8x128xf32, #tpu.memory_space<vmem>>, vector<8x128xf32>
    tpu.vector_store %arg4[%c0_11, %c0_12], %31 {strides = array<i32>} : memref<8x128xf32, #tpu.memory_space<vmem>>, vector<8x128xf32>,
    return
  }
  func.func @transform_0(%arg0: i32) -> (i32, i32) {
    %c0_i32 = arith.constant 0 : i32
    %c0_i32_0 = arith.constant 0 : i32
    return %arg0, %c0_i32 : i32, i32
  }
  func.func @transform_1(%arg0: i32) -> (i32, i32) {
    %c0_i32 = arith.constant 0 : i32
    %c0_i32_0 = arith.constant 0 : i32
    %c0_i32_1 = arith.constant 0 : i32
    return %c0_i32, %c0_i32_0 : i32, i32
  }
  func.func @transform_2(%arg0: i32) -> (i32, i32) {
    %c0_i32 = arith.constant 0 : i32
    %c0_i32_0 = arith.constant 0 : i32
    %c0_i32_1 = arith.constant 0 : i32
    return %c0_i32, %c0_i32_0 : i32, i32
  }
  func.func @transform_3(%arg0: i32) -> (i32, i32) {
    %c0_i32 = arith.constant 0 : i32
    %c0_i32_0 = arith.constant 0 : i32
    return %arg0, %c0_i32 : i32, i32
  }
}

</mosaic_0001>

<llo_original>
// kernel: tpu_custom_call.1
$region0: #{tpu_custom_call.1}
  #allocation0 [shape = 'u32[]', space=smem, size = 0x4, offset = 0x4, fixed_abs, tag = 'smem constant byte address 0x4 - core index']
  #allocation1 [shape = 'u32[72,128]{1,0:T(1,128)}', space=vmem, size = 0x9000, scoped, tag = 'internal scratch']
  %s0 = inlined_call_operand.hbm [shape: bf16[8,16], index: 0, kind: input, shape index: {}]
  %s1 = inlined_call_operand.hbm [shape: bf16[128,512], index: 1, kind: input, shape index: {}]
  %s2 = inlined_call_operand.hbm [shape: f32[8,128], index: 2, kind: input, shape index: {}]
  %s3 = inlined_call_operand.hbm [shape: f32[8,128], index: 3, kind: output, shape index: {}]
  %s4 = sld [smem:[#allocation0]]
  $region34: #{tpu_custom_call.1} parent=0
    _
  %s6 = ssub.s32 1, %s4
  %s7 = scalar_select 0, %s6, %s4
  $region1: #{tpu_custom_call.1} parent=0
    #allocation2 [shape = 'u8[2048]{0}', space=vmem, size = 0x800, scoped, tag = 'input window, operand 0, single buffered']
    #allocation3 [shape = 's32[1]{0}', space=sflag, size = 0x4, scoped, tag = 'scoped memory for tpu_custom_call.1']
    #allocation4 [shape = 's32[1]{0}', space=sflag, size = 0x4, scoped, tag = 'scoped memory for tpu_custom_call.1']
    #allocation5 [shape = 'u8[131072]{0}', space=vmem, size = 0x20000, scoped, tag = 'input window, operand 1, single buffered']
    #allocation6 [shape = 's32[1]{0}', space=sflag, size = 0x4, scoped, tag = 'scoped memory for tpu_custom_call.1']
    #allocation7 [shape = 'u8[4096]{0}', space=vmem, size = 0x1000, scoped, tag = 'input window, operand 2, single buffered']
    #allocation8 [shape = 'u8[4096]{0}', space=vmem, size = 0x1000, scoped, tag = 'output window, operand 0, single buffered']
    %8 = vsyncpa [#allocation3], 0
    %9 = vsyncpa [#allocation6], 0
    %10 = vsyncpa [#allocation4], 0
    // Predicated region
    $region2: #{tpu_custom_call.1} parent=1 // pred_check
      _
    $region3: #{tpu_custom_call.1} parent=1 // pred_check_branch
      %12 = sbr.rel (0) target = $region5
    $region4: #{tpu_custom_call.1} parent=1 // pred_region
      %14 = vsyncadd [#allocation3], 0
      %s16 = sshll.u32 %s0, 4
      %s17 = int_to_ptr.hbm [resolvable:$true] %s16
      %s18 = sshll.u32 [#allocation2], 4
      %s19 = int_to_ptr.vmem [resolvable:$true] %s18
      %21 = dma.hbm_to_vmem [thread:$0]  %s17, 64, %s19, [#allocation3]
    $region5: #{tpu_custom_call.1} parent=1 // pred_fallthru
      _
    // Predicated region
    $region6: #{tpu_custom_call.1} parent=1 // pred_check
      _
    $region7: #{tpu_custom_call.1} parent=1 // pred_check_branch
      %23 = sbr.rel (0) target = $region9
    $region8: #{tpu_custom_call.1} parent=1 // pred_region
      %25 = vsyncadd [#allocation6], 0
      %s26 = sshll.u32 %s1, 4
      %s27 = int_to_ptr.hbm [resolvable:$true] %s26
      %s28 = sshll.u32 [#allocation5], 4
      %s29 = int_to_ptr.vmem [resolvable:$true] %s28
      %34 = dma.hbm_to_vmem [thread:$0]  %s27, 4096, %s29, [#allocation6], 256, 256, 16
    $region9: #{tpu_custom_call.1} parent=1 // pred_fallthru
      _
    // Predicated region
    $region10: #{tpu_custom_call.1} parent=1 // pred_check
      _
    $region11: #{tpu_custom_call.1} parent=1 // pred_check_branch
      %36 = sbr.rel (0) target = $region13
    $region12: #{tpu_custom_call.1} parent=1 // pred_region
      %38 = vsyncadd [#allocation6], 0
      %s40 = sshll.u32 %s2, 4
      %s41 = int_to_ptr.hbm [resolvable:$true] %s40
      %s42 = sshll.u32 [#allocation7], 4
      %s43 = int_to_ptr.vmem [resolvable:$true] %s42
      %45 = dma.hbm_to_vmem [thread:$0]  %s41, 128, %s43, [#allocation6]
    $region13: #{tpu_custom_call.1} parent=1 // pred_fallthru
      _
    // Predicated region
    $region14: #{tpu_custom_call.1} parent=1 // pred_check
      _
    $region15: #{tpu_custom_call.1} parent=1 // pred_check_branch
      %47 = sbr.rel (0) target = $region17
    $region16: #{tpu_custom_call.1} parent=1 // pred_region
      %49 = dma.done [#allocation3], 64
    $region17: #{tpu_custom_call.1} parent=1 // pred_fallthru
      _
    // Predicated region
    $region18: #{tpu_custom_call.1} parent=1 // pred_check
      _
    $region19: #{tpu_custom_call.1} parent=1 // pred_check_branch
      %51 = sbr.rel (0) target = $region21
    $region20: #{tpu_custom_call.1} parent=1 // pred_region
      %53 = dma.done [#allocation6], 4096
    $region21: #{tpu_custom_call.1} parent=1 // pred_fallthru
      _
    // Predicated region
    $region22: #{tpu_custom_call.1} parent=1 // pred_check
      _
    $region23: #{tpu_custom_call.1} parent=1 // pred_check_branch
      %55 = sbr.rel (0) target = $region25
    $region24: #{tpu_custom_call.1} parent=1 // pred_region
      %57 = dma.done [#allocation6], 128
    $region25: #{tpu_custom_call.1} parent=1 // pred_fallthru
      _
    %v59 = vld [vmem:[#allocation2] sm:$0xf]
    %v60 = vld [vmem:[#allocation5] sm:$0xff]
    %v61 = vld [vmem:[#allocation5 + $0x8] sm:$0xff]
    %v62 = vld [vmem:[#allocation5 + $0x10] sm:$0xff]
    %v63 = vld [vmem:[#allocation5 + $0x18] sm:$0xff]
    %v64 = vld [vmem:[#allocation5 + $0x20] sm:$0xff]
    %v65 = vld [vmem:[#allocation5 + $0x28] sm:$0xff]
    %v66 = vld [vmem:[#allocation5 + $0x30] sm:$0xff]
    %v67 = vld [vmem:[#allocation5 + $0x38] sm:$0xff]
    %v68 = vld [vmem:[#allocation5 + $0x40] sm:$0xff]
    %v69 = vld [vmem:[#allocation5 + $0x48] sm:$0xff]
    %v70 = vld [vmem:[#allocation5 + $0x50] sm:$0xff]
    %v71 = vld [vmem:[#allocation5 + $0x58] sm:$0xff]
    %v72 = vld [vmem:[#allocation5 + $0x60] sm:$0xff]
    %v73 = vld [vmem:[#allocation5 + $0x68] sm:$0xff]
    %v74 = vld [vmem:[#allocation5 + $0x70] sm:$0xff]
    %v75 = vld [vmem:[#allocation5 + $0x78] sm:$0xff]
    %v76 = vld [vmem:[#allocation5 + $0x80] sm:$0xff]
    %v77 = vld [vmem:[#allocation5 + $0x88] sm:$0xff]
    %v78 = vld [vmem:[#allocation5 + $0x90] sm:$0xff]
    %v79 = vld [vmem:[#allocation5 + $0x98] sm:$0xff]
    %v80 = vld [vmem:[#allocation5 + $0xa0] sm:$0xff]
    %v81 = vld [vmem:[#allocation5 + $0xa8] sm:$0xff]
    %v82 = vld [vmem:[#allocation5 + $0xb0] sm:$0xff]
    %v83 = vld [vmem:[#allocation5 + $0xb8] sm:$0xff]
    %v84 = vld [vmem:[#allocation5 + $0xc0] sm:$0xff]
    %v85 = vld [vmem:[#allocation5 + $0xc8] sm:$0xff]
    %v86 = vld [vmem:[#allocation5 + $0xd0] sm:$0xff]
    %v87 = vld [vmem:[#allocation5 + $0xd8] sm:$0xff]
    %v88 = vld [vmem:[#allocation5 + $0xe0] sm:$0xff]
    %v89 = vld [vmem:[#allocation5 + $0xe8] sm:$0xff]
    %v90 = vld [vmem:[#allocation5 + $0xf0] sm:$0xff]
    %v91 = vld [vmem:[#allocation5 + $0xf8] sm:$0xff]
    %v92 = vld [vmem:[#allocation7] sm:$0xff]
    %v93 = vperm.slane %v92, 0
    %v96 = vunpack.c.l.b16 %v60
    %v97 = vunpack.c.l.b16 %v62
    %v98 = vpack.c.b16 %v97, %v96
    %vm100 = vcmask 130048
    %v102 = vsel %vm100, %v59, 0
    %104 = vmatpush.bf16.msra.mxu0 0
    %105 = vmatpush.bf16.msra.mxu0 0
    %106 = vmatpush.bf16.msra.mxu0 0
    %107 = vmatpush.bf16.msra.mxu0 0
    %108 = vmatpush.bf16.msra.mxu0 0
    %109 = vmatpush.bf16.msra.mxu0 0
    %110 = vmatpush.bf16.msra.mxu0 0
    %111 = vmatpush.bf16.msra.mxu0 %v98
    %112 = vmatmul.bf16.gmra.mxu0 %v102
    %v113 = vpop.f32.mrf.mxu0
    %v114 = vadd.f32 %v93, %v113
    %v115 = vpop.f32.mrf.mxu0
    %116 = vdwg.mxu0
    %v117 = vmax.f32 %v114, 0.0
    %v118 = vpack.c.bf16 %v117, %v117
    %v119 = vperm.slane %v92, 1
    %v134 = vunpack.c.h.b16 %v60
    %v135 = vunpack.c.h.b16 %v62
    %v136 = vunpack.c.h.b16 %v64
    %v137 = vunpack.c.h.b16 %v66
    %v138 = vunpack.c.h.b16 %v68
    %v139 = vunpack.c.h.b16 %v70
    %v140 = vunpack.c.h.b16 %v72
    %v141 = vunpack.c.h.b16 %v74
    %v142 = vunpack.c.h.b16 %v76
    %v143 = vunpack.c.h.b16 %v78
    %v144 = vunpack.c.h.b16 %v80
    %v145 = vunpack.c.h.b16 %v82
    %v146 = vunpack.c.h.b16 %v84
    %v147 = vunpack.c.h.b16 %v86
    %v148 = vunpack.c.h.b16 %v88
    %v149 = vunpack.c.h.b16 %v90
    %v150 = vpack.c.b16 %v135, %v134
    %v151 = vpack.c.b16 %v137, %v136
    %v152 = vpack.c.b16 %v139, %v138
    %v153 = vpack.c.b16 %v141, %v140
    %v154 = vpack.c.b16 %v143, %v142
    %v155 = vpack.c.b16 %v145, %v144
    %v156 = vpack.c.b16 %v147, %v146
    %v157 = vpack.c.b16 %v149, %v148
    %166 = vmatpush.bf16.msra.mxu0 %v157
    %167 = vmatpush.bf16.msra.mxu0 %v156
    %168 = vmatpush.bf16.msra.mxu0 %v155
    %169 = vmatpush.bf16.msra.mxu0 %v154
    %170 = vmatpush.bf16.msra.mxu0 %v153
    %171 = vmatpush.bf16.msra.mxu0 %v152
    %172 = vmatpush.bf16.msra.mxu0 %v151
    %173 = vmatpush.bf16.msra.mxu0 %v150
    %174 = vmatmul.bf16.gmra.mxu0 %v118
    %v175 = vpop.f32.mrf.mxu0
    %v176 = vadd.f32 %v119, %v175
    %v177 = vpop.f32.mrf.mxu0
    %178 = vdwg.mxu0
    %v179 = vmax.f32 %v176, 0.0
    %v180 = vpack.c.bf16 %v179, %v179
    %v181 = vperm.slane %v92, 2
    %v198 = vunpack.c.l.b16 %v61
    %v199 = vunpack.c.l.b16 %v63
    %v200 = vunpack.c.l.b16 %v65
    %v201 = vunpack.c.l.b16 %v67
    %v202 = vunpack.c.l.b16 %v69
    %v203 = vunpack.c.l.b16 %v71
    %v204 = vunpack.c.l.b16 %v73
    %v205 = vunpack.c.l.b16 %v75
    %v206 = vunpack.c.l.b16 %v77
    %v207 = vunpack.c.l.b16 %v79
    %v208 = vunpack.c.l.b16 %v81
    %v209 = vunpack.c.l.b16 %v83
    %v210 = vunpack.c.l.b16 %v85
    %v211 = vunpack.c.l.b16 %v87
    %v212 = vunpack.c.l.b16 %v89
    %v213 = vunpack.c.l.b16 %v91
    %v214 = vpack.c.b16 %v199, %v198
    %v215 = vpack.c.b16 %v201, %v200
    %v216 = vpack.c.b16 %v203, %v202
    %v217 = vpack.c.b16 %v205, %v204
    %v218 = vpack.c.b16 %v207, %v206
    %v219 = vpack.c.b16 %v209, %v208
    %v220 = vpack.c.b16 %v211, %v210
    %v221 = vpack.c.b16 %v213, %v212
    %230 = vmatpush.bf16.msra.mxu0 %v221
    %231 = vmatpush.bf16.msra.mxu0 %v220
    %232 = vmatpush.bf16.msra.mxu0 %v219
    %233 = vmatpush.bf16.msra.mxu0 %v218
    %234 = vmatpush.bf16.msra.mxu0 %v217
    %235 = vmatpush.bf16.msra.mxu0 %v216
    %236 = vmatpush.bf16.msra.mxu0 %v215
    %237 = vmatpush.bf16.msra.mxu0 %v214
    %238 = vmatmul.bf16.gmra.mxu0 %v180
    %v239 = vpop.f32.mrf.mxu0
    %v240 = vadd.f32 %v181, %v239
    %v241 = vpop.f32.mrf.mxu0
    %242 = vdwg.mxu0
    %v243 = vmax.f32 %v240, 0.0
    %v244 = vpack.c.bf16 %v243, %v243
    %v245 = vperm.slane %v92, 3
    %v246 = vunpack.c.h.b16 %v61
    %v247 = vunpack.c.h.b16 %v63
    %v248 = vunpack.c.h.b16 %v65
    %v249 = vunpack.c.h.b16 %v67
    %v250 = vunpack.c.h.b16 %v69
    %v251 = vunpack.c.h.b16 %v71
    %v252 = vunpack.c.h.b16 %v73
    %v253 = vunpack.c.h.b16 %v75
    %v254 = vunpack.c.h.b16 %v77
    %v255 = vunpack.c.h.b16 %v79
    %v256 = vunpack.c.h.b16 %v81
    %v257 = vunpack.c.h.b16 %v83
    %v258 = vunpack.c.h.b16 %v85
    %v259 = vunpack.c.h.b16 %v87
    %v260 = vunpack.c.h.b16 %v89
    %v261 = vunpack.c.h.b16 %v91
    %v262 = vpack.c.b16 %v247, %v246
    %v263 = vpack.c.b16 %v249, %v248
    %v264 = vpack.c.b16 %v251, %v250
    %v265 = vpack.c.b16 %v253, %v252
    %v266 = vpack.c.b16 %v255, %v254
    %v267 = vpack.c.b16 %v257, %v256
    %v268 = vpack.c.b16 %v259, %v258
    %v269 = vpack.c.b16 %v261, %v260
    %278 = vmatpush.bf16.msra.mxu0 %v269
    %279 = vmatpush.bf16.msra.mxu0 %v268
    %280 = vmatpush.bf16.msra.mxu0 %v267
    %281 = vmatpush.bf16.msra.mxu0 %v266
    %282 = vmatpush.bf16.msra.mxu0 %v265
    %283 = vmatpush.bf16.msra.mxu0 %v264
    %284 = vmatpush.bf16.msra.mxu0 %v263
    %285 = vmatpush.bf16.msra.mxu0 %v262
    %286 = vmatmul.bf16.gmra.mxu0 %v244
    %v287 = vpop.f32.mrf.mxu0
    %v288 = vadd.f32 %v245, %v287
    %v289 = vpop.f32.mrf.mxu0
    %290 = vdwg.mxu0
    %291 = vst [vmem:[#allocation8] sm:$0xff] %v288
    // Predicated region
    $region26: #{tpu_custom_call.1} parent=1 // pred_check
      _
    $region27: #{tpu_custom_call.1} parent=1 // pred_check_branch
      %293 = sbr.rel (0) target = $region29
    $region28: #{tpu_custom_call.1} parent=1 // pred_region
      %295 = vsyncadd [#allocation4], 0
      %s297 = sshll.u32 [#allocation8], 4
      %s298 = int_to_ptr.vmem [resolvable:$true] %s297
      %s299 = sshll.u32 %s3, 4
      %s300 = int_to_ptr.hbm [resolvable:$true] %s299
      %302 = dma.vmem_to_hbm [thread:$0]  %s298, 128, %s300, [#allocation4]
    $region29: #{tpu_custom_call.1} parent=1 // pred_fallthru
      _
    // Predicated region
    $region30: #{tpu_custom_call.1} parent=1 // pred_check
      _
    $region31: #{tpu_custom_call.1} parent=1 // pred_check_branch
      %304 = sbr.rel (0) target = $region33
    $region32: #{tpu_custom_call.1} parent=1 // pred_region
      %306 = dma.done [#allocation4], 128
    $region33: #{tpu_custom_call.1} parent=1 // pred_fallthru
      _
    %307 = vsyncpa [#allocation3], 1
    %308 = vsyncpa [#allocation6], 1
    %309 = vsyncpa [#allocation4], 1

</llo_original>
